<compile_context>
chip_gen: v7x
topology: tpu7x:2x2x1
jax: 0.10.0
libtpu: 0.0.40
codegen_flags: <defaults>
</compile_context>

<pallas_src>
import jax
import jax.numpy as jnp
from jax import lax
from jax.experimental import pallas as pl
from jax.experimental.pallas import tpu as pltpu

EPS = 1e-5
LANE = 128


# ------------------------------ Pallas kernel ------------------------------

def _make_mltl_kernel(accumulate):
    """Fused embedder + (avgpool+fc folded) head on one (Cin, tile_hw) slab.

    Produces an (8, tile_hw) lane-dense partial (the logit is its full sum).
    If `accumulate`, the partial is accumulated into a per-batch resident
    output block over the spatial-tile (reduction) grid axis; otherwise each
    grid step writes its own output block (no init/accumulate machinery).
    """

    def kernel(x_ref, w1_ref, w2_ref, b2_ref, w3_ref, b3_ref, weff_ref, o_ref):
        x = x_ref[...]                                    # (Cin, T) bf16
        a1 = jnp.maximum(
            jnp.dot(w1_ref[...], x, preferred_element_type=jnp.float32), 0.0)
        a2 = jnp.maximum(
            jnp.dot(w2_ref[...], a1.astype(jnp.bfloat16),
                    preferred_element_type=jnp.float32) + b2_ref[...], 0.0)
        a3 = jnp.maximum(
            jnp.dot(w3_ref[...], a2.astype(jnp.bfloat16),
                    preferred_element_type=jnp.float32) + b3_ref[...], 0.0)

        # Head: per-pixel weights (BN3 + avgpool + fc already folded into weff).
        prod = a3 * weff_ref[...]                         # (E_pad, T) f32
        # Fold sublane groups of 8 -> (8, T); no cross-lane movement.
        partial = prod[0:8, :]
        for r in range(8, prod.shape[0], 8):
            partial = partial + prod[r:r + 8, :]

        if accumulate:
            @pl.when(pl.program_id(1) == 0)
            def _init():
                o_ref[...] = jnp.zeros_like(o_ref)

            o_ref[...] += partial
        else:
            o_ref[...] = partial

    return kernel


# ----------------------------- Pallas wrapper ------------------------------

def mltl_pallas(x, w1t, w2t, b2, w3t, b3, weff, tile_hw, split_reduction):
    """x: (B, Cin, HW_pad) bf16; weff: (E_pad, HW_pad) bf16.

    Returns an (B, R, tile_hw) f32 partial-sum tensor whose sum over the last
    two axes is the per-batch logit (before bias/sigmoid)."""
    bsz, cin, hw_pad = x.shape
    e_pad = w3t.shape[0]
    n_tiles = hw_pad // tile_hw
    accumulate = (n_tiles > 1) and (not split_reduction)
    kernel = _make_mltl_kernel(accumulate)

    full = lambda b, t: (0, 0)
    in_specs = [
        pl.BlockSpec((None, cin, tile_hw), lambda b, t: (b, 0, t)),
        pl.BlockSpec(w1t.shape, full),
        pl.BlockSpec(w2t.shape, full),
        pl.BlockSpec(b2.shape, full),
        pl.BlockSpec(w3t.shape, full),
        pl.BlockSpec(b3.shape, full),
        pl.BlockSpec((e_pad, tile_hw), lambda b, t: (0, t)),
    ]

    if accumulate:
        # Per-batch resident accumulator block; tile axis is the reduction.
        out_rows = 8
        out_spec = pl.BlockSpec((None, 8, tile_hw), lambda b, t: (b, 0, 0))
        dims = ("parallel", "arbitrary")
    else:
        # One block per (batch, tile): no accumulator machinery; both axes
        # parallel (lets v7x split the reduction across cores when B == 1).
        out_rows = 8 * n_tiles
        out_spec = pl.BlockSpec((None, 8, tile_hw), lambda b, t: (b, t, 0))
        dims = ("parallel", "parallel")

    return pl.pallas_call(
        kernel,
        out_shape=jax.ShapeDtypeStruct((bsz, out_rows, tile_hw), jnp.float32),
        grid=(bsz, n_tiles),
        in_specs=in_specs,
        out_specs=out_spec,
        compiler_params=pltpu.CompilerParams(
            dimension_semantics=dims,
            vmem_limit_bytes=32 * 1024 * 1024),
    )(x, w1t, w2t, b2, w3t, b3, weff)


# ------------------------------- JAX glue -----------------------------------

def _interp_matrix(n_in, n_out):
    """Row-interpolation matrix for bilinear upsampling, align_corners=True."""
    if n_in == n_out:
        return jnp.eye(n_out, dtype=jnp.float32)
    src = jnp.arange(n_out, dtype=jnp.float32) * (n_in - 1) / (n_out - 1)
    lo = jnp.clip(jnp.floor(src).astype(jnp.int32), 0, n_in - 2)
    frac = src - lo.astype(jnp.float32)
    rows = jnp.arange(n_out)
    m = jnp.zeros((n_out, n_in), jnp.float32)
    m = m.at[rows, lo].add(1.0 - frac)
    m = m.at[rows, lo + 1].add(frac)
    return m


def fuse_layers_cmajor(xs):
    """fuseLayers: bilinear upsample (align_corners=True) to xs[0]'s size and
    concat on channels -- emitted directly in channel-major (B, C, H*W) layout
    (NCHW input needs no transpose)."""
    b0, c0, h, w = xs[0].shape
    outs = [xs[0].reshape(b0, c0, h * w)]
    for layer in xs[1:]:
        s = h // layer.shape[2]
        mh = _interp_matrix(layer.shape[2], layer.shape[2] * s)
        mw = _interp_matrix(layer.shape[3], layer.shape[3] * s)
        up = jnp.einsum("ph,bchw,qw->bcpq", mh, layer, mw)
        outs.append(up.reshape(layer.shape[0], layer.shape[1], h * w))
    return jnp.concatenate(outs, axis=1)                  # (B, sum(C), H*W)


def _fold_params_cmajor(params, h, w, embedding_dim, out_dim):
    """Fold eval-mode BN into conv weights and avgpool+BN3+fc into weff/bias,
    all in channel-major (C_out, C_in) / (E, HW) layout."""
    s1 = params["g1"] * lax.rsqrt(params["v1"] + EPS)     # (1, C1)
    t1 = params["b1"] - params["m1"] * s1
    s2 = params["g2"] * lax.rsqrt(params["v2"] + EPS)     # (1, C2)
    t2 = params["b2"] - params["m2"] * s2
    s3 = params["g3"] * lax.rsqrt(params["v3"] + EPS)     # (1, E)
    t3 = params["b3"] - params["m3"] * s3

    w1t = params["w1"].T                                  # (C1, Cin)
    w2t = (params["w2"] * s1.reshape(-1, 1)).T            # (C2, C1) = (diag(s1)W2)^T
    b2 = (t1 @ params["w2"]).reshape(-1, 1)               # (C2, 1)
    w3t = (params["w3"] * s2.reshape(-1, 1)).T            # (E, C2)
    b3 = (t2 @ params["w3"]).reshape(-1, 1)               # (E, 1)

    # Fold AvgPool2d(2,2) + fc: weff[e, h*W+w] = 0.25 * Wfc[e, h//2, w//2]
    # (Wfc flattened in PyTorch NCHW order: index = e*OD*OD + p*OD + q).
    wfc = params["fc_w"].reshape(embedding_dim, out_dim, out_dim)
    wfc = jnp.repeat(jnp.repeat(wfc, 2, axis=1), 2, axis=2)      # (E, H, W)
    weff_raw = 0.25 * wfc.reshape(embedding_dim, h * w)          # (E, HW)
    # Fold BN3 (embed = a3*s3 + t3) into the head.
    const = jnp.sum(weff_raw * t3.reshape(-1, 1))
    weff = weff_raw * s3.reshape(-1, 1)                          # (E, HW)
    bias_eff = params["fc_b"][0] + const                         # scalar

    # Pad the embedding dim to a multiple of 8 (clean sublane tiling).  Pad
    # rows of w3t/b3 are zero => padded a3 rows are relu(0)=0, and padded weff
    # rows are zero => no contribution to the logit.
    e_pad = ((embedding_dim + 7) // 8) * 8
    if e_pad != embedding_dim:
        pe = e_pad - embedding_dim
        w3t = jnp.pad(w3t, ((0, pe), (0, 0)))
        b3 = jnp.pad(b3, ((0, pe), (0, 0)))
        weff = jnp.pad(weff, ((0, pe), (0, 0)))
    return w1t, w2t, b2, w3t, b3, weff, bias_eff


def _pick_tile_hw(hw, cin, c1, c2, e_pad):
    """Largest lane-aligned spatial tile within a conservative VMEM budget."""
    # bytes per pixel: x bf16 (2 bufs) + weff bf16 (2 bufs) + f32 activations
    # (a1, a2, a3, prod, partial) + resident f32 output block (2 bufs).
    bpp = (2 * 2 * cin) + (2 * 2 * e_pad) + 4 * (c1 + c2 + 2 * e_pad + 8) + 2 * 4 * 8
    budget = 24 * 1024 * 1024                     # leaves headroom in 32 MiB scoped VMEM
    by_budget = max(LANE, (budget // bpp) // LANE * LANE)
    hw_lane = pl.cdiv(hw, LANE) * LANE
    return min(hw_lane, 32 * 1024, by_budget)


def init_params(key, filters, widths, embedding_dim):
    in_chan = sum(filters)
    c1, c2 = in_chan // 2, in_chan // 4
    out_dim = max(widths) // 2
    ks = jax.random.split(key, 17)
    p = {
        "w1": 0.1 * jax.random.normal(ks[0], (in_chan, c1), jnp.float32),
        "w2": 0.1 * jax.random.normal(ks[1], (c1, c2), jnp.float32),
        "w3": 0.1 * jax.random.normal(ks[2], (c2, embedding_dim), jnp.float32),
        "fc_w": 0.01 * jax.random.normal(
            ks[3], (1, embedding_dim * out_dim * out_dim), jnp.float32),
        "fc_b": 0.01 * jax.random.normal(ks[4], (1,), jnp.float32),
    }
    kidx = 5
    for layer, c in zip(("1", "2", "3"), (c1, c2, embedding_dim)):
        kg, kb, km, kv = ks[kidx:kidx + 4]
        kidx += 4
        p["g" + layer] = 1.0 + 0.1 * jax.random.normal(kg, (1, c), jnp.float32)
        p["b" + layer] = 0.1 * jax.random.normal(kb, (1, c), jnp.float32)
        p["m" + layer] = 0.1 * jax.random.normal(km, (1, c), jnp.float32)
        p["v" + layer] = 1.0 + 0.1 * jnp.abs(jax.random.normal(kv, (1, c), jnp.float32))
    return p


def mltl_forward(xs, params, embedding_dim, out_dim):
    fused = fuse_layers_cmajor(xs)                        # (B, Cin, HW) f32
    bsz, cin, hw = fused.shape
    h, w = xs[0].shape[2], xs[0].shape[3]

    w1t, w2t, b2, w3t, b3, weff, bias_eff = _fold_params_cmajor(
        params, h, w, embedding_dim, out_dim)
    c1, c2, e_pad = w1t.shape[0], w2t.shape[0], w3t.shape[0]

    tile_hw = _pick_tile_hw(hw, cin, c1, c2, e_pad)
    hw_pad = pl.cdiv(hw, tile_hw) * tile_hw

    # bf16 streams (dots accumulate in f32 inside the kernel); biases stay f32.
    x = fused.astype(jnp.bfloat16)
    weff = weff.astype(jnp.bfloat16)
    if hw_pad != hw:
        # Padded pixels produce nonzero a3 (folded biases) but weff's padded
        # lanes are exactly zero, so they contribute nothing to the logit.
        x = jnp.pad(x, ((0, 0), (0, 0), (0, hw_pad - hw)))
        weff = jnp.pad(weff, ((0, 0), (0, hw_pad - hw)))
    w1t = w1t.astype(jnp.bfloat16)
    w2t = w2t.astype(jnp.bfloat16)
    w3t = w3t.astype(jnp.bfloat16)

    # With a single batch, split the spatial reduction across grid steps
    # ("parallel") so v7x's two TensorCores both get work.
    split_reduction = (bsz == 1)
    out_blk = mltl_pallas(x, w1t, w2t, b2, w3t, b3, weff, tile_hw, split_reduction)
    logits = jnp.sum(out_blk, axis=(1, 2)) + bias_eff
    return jax.nn.sigmoid(logits)                         # (B,)


def mltl_reference(xs, params, embedding_dim, out_dim):
    """Pure-JAX f32 reference mirroring the PyTorch forward (eval-mode BN)."""
    fused = fuse_layers_cmajor(xs)                        # (B, Cin, HW)
    bsz, cin, hw = fused.shape
    h, w = xs[0].shape[2], xs[0].shape[3]
    x = jnp.transpose(fused, (0, 2, 1)).reshape(-1, cin)  # (B*HW, Cin)

    def blk(hh, wgt, g, bb, m, v):
        hh = jnp.maximum(hh @ wgt, 0.0)
        return (hh - m) * (g / jnp.sqrt(v + EPS)) + bb

    hh = blk(x, params["w1"], params["g1"], params["b1"], params["m1"], params["v1"])
    hh = blk(hh, params["w2"], params["g2"], params["b2"], params["m2"], params["v2"])
    hh = blk(hh, params["w3"], params["g3"], params["b3"], params["m3"], params["v3"])
    embed = hh.reshape(bsz, h, w, embedding_dim)
    pooled = embed.reshape(bsz, h // 2, 2, w // 2, 2, embedding_dim).mean(axis=(2, 4))
    pooled_nchw = jnp.transpose(pooled, (0, 3, 1, 2)).reshape(bsz, -1)
    y = pooled_nchw @ params["fc_w"].T + params["fc_b"]
    return jax.nn.sigmoid(y)[:, 0]


if __name__ == "__main__":
    filters = [8, 8]          # channels of each pyramid level
    widths = [16, 8]          # spatial sizes of each pyramid level
    embedding_dim = 32
    out_dim = max(widths) // 2
    batch = 2

    key = jax.random.PRNGKey(0)
    kx0, kx1, kp = jax.random.split(key, 3)
    xs = [
        jax.random.normal(kx0, (batch, filters[0], widths[0], widths[0]), jnp.float32),
        jax.random.normal(kx1, (batch, filters[1], widths[1], widths[1]), jnp.float32),
    ]
    params = init_params(kp, filters, widths, embedding_dim)

    out = mltl_forward(xs, params, embedding_dim, out_dim)
    out = jax.block_until_ready(out)

    ref = mltl_reference(xs, params, embedding_dim, out_dim)
    assert out.shape == (batch,)
    # bf16 input/weight streams (f32 accumulation) -> slightly looser tolerance
    # than the pure-f32 path; outputs are sigmoid probabilities near 0.5.
    err = float(jnp.max(jnp.abs(out - ref)))
    assert err < 2e-3, err

    print("KERNEL_OK")
</pallas_src>

<mosaic_0001>
module attributes {stable_mosaic.version = 11 : i64} {
  func.func @kernel(%arg0: i32, %arg1: i32, %arg2: memref<1x16x256xbf16, #tpu.memory_space<vmem>>, %arg3: memref<8x16xbf16, #tpu.memory_space<vmem>>, %arg4: memref<4x8xbf16, #tpu.memory_space<vmem>>, %arg5: memref<4x1xf32, #tpu.memory_space<vmem>>, %arg6: memref<32x4xbf16, #tpu.memory_space<vmem>>, %arg7: memref<32x1xf32, #tpu.memory_space<vmem>>, %arg8: memref<32x256xbf16, #tpu.memory_space<vmem>>, %arg9: memref<1x8x256xf32, #tpu.memory_space<vmem>>) attributes {dimension_semantics = [#tpu.dimension_semantics<parallel>, #tpu.dimension_semantics<parallel>], iteration_bounds = array<i64: 2, 1>, scalar_prefetch = 0 : i64, scratch_operands = 0 : i64, tpu.core_type = #tpu.core_type<tc>, window_params = [{transform_indices = @transform_0, window_bounds = array<i64: 1, 16, 256>}, {pipeline_mode = #tpu.pipeline_mode<synchronous>, transform_indices = @transform_1, window_bounds = array<i64: 8, 16>}, {pipeline_mode = #tpu.pipeline_mode<synchronous>, transform_indices = @transform_2, window_bounds = array<i64: 4, 8>}, {pipeline_mode = #tpu.pipeline_mode<synchronous>, transform_indices = @transform_3, window_bounds = array<i64: 4, 1>}, {pipeline_mode = #tpu.pipeline_mode<synchronous>, transform_indices = @transform_4, window_bounds = array<i64: 32, 4>}, {pipeline_mode = #tpu.pipeline_mode<synchronous>, transform_indices = @transform_5, window_bounds = array<i64: 32, 1>}, {transform_indices = @transform_6, window_bounds = array<i64: 32, 256>}, {transform_indices = @transform_7, window_bounds = array<i64: 1, 8, 256>}]} {
    %c0 = arith.constant 0 : index
    %c0_0 = arith.constant 0 : index
    %c0_1 = arith.constant 0 : index
    %0 = vector.load %arg2[%c0, %c0_0, %c0_1] : memref<1x16x256xbf16, #tpu.memory_space<vmem>>, vector<1x16x256xbf16>
    %1 = vector.shape_cast %0 : vector<1x16x256xbf16> to vector<16x256xbf16>
    %c0_2 = arith.constant 0 : index
    %c0_3 = arith.constant 0 : index
    %2 = vector.load %arg3[%c0_2, %c0_3] : memref<8x16xbf16, #tpu.memory_space<vmem>>, vector<8x16xbf16>
    %cst = arith.constant dense<0.000000e+00> : vector<8x256xf32>
    %3 = tpu.matmul %2, %1, %cst {dimension_numbers = #tpu.dot_dimension_numbers<[1], [0], [0], [1], [0, 0, 1, 1], [], []>} : vector<8x16xbf16>, vector<16x256xbf16>, vector<8x256xf32> -> vector<8x256xf32>
    %cst_4 = arith.constant 0.000000e+00 : f32
    %4 = vector.broadcast %cst_4 : f32 to vector<8x256xf32>
    %5 = arith.maximumf %3, %4 : vector<8x256xf32>
    %c0_5 = arith.constant 0 : index
    %c0_6 = arith.constant 0 : index
    %6 = vector.load %arg4[%c0_5, %c0_6] : memref<4x8xbf16, #tpu.memory_space<vmem>>, vector<4x8xbf16>
    %7 = arith.truncf %5 : vector<8x256xf32> to vector<8x256xbf16>
    %cst_7 = arith.constant dense<0.000000e+00> : vector<4x256xf32>
    %8 = tpu.matmul %6, %7, %cst_7 {dimension_numbers = #tpu.dot_dimension_numbers<[1], [0], [0], [1], [0, 0, 1, 1], [], []>} : vector<4x8xbf16>, vector<8x256xbf16>, vector<4x256xf32> -> vector<4x256xf32>
    %c0_8 = arith.constant 0 : index
    %c0_9 = arith.constant 0 : index
    %9 = vector.load %arg5[%c0_8, %c0_9] : memref<4x1xf32, #tpu.memory_space<vmem>>, vector<4x1xf32>
    %10 = vector.broadcast %9 : vector<4x1xf32> to vector<4x256xf32>
    %11 = arith.addf %8, %10 : vector<4x256xf32>
    %cst_10 = arith.constant 0.000000e+00 : f32
    %12 = vector.broadcast %cst_10 : f32 to vector<4x256xf32>
    %13 = arith.maximumf %11, %12 : vector<4x256xf32>
    %c0_11 = arith.constant 0 : index
    %c0_12 = arith.constant 0 : index
    %14 = vector.load %arg6[%c0_11, %c0_12] : memref<32x4xbf16, #tpu.memory_space<vmem>>, vector<32x4xbf16>
    %15 = arith.truncf %13 : vector<4x256xf32> to vector<4x256xbf16>
    %cst_13 = arith.constant dense<0.000000e+00> : vector<32x256xf32>
    %16 = tpu.matmul %14, %15, %cst_13 {dimension_numbers = #tpu.dot_dimension_numbers<[1], [0], [0], [1], [0, 0, 1, 1], [], []>} : vector<32x4xbf16>, vector<4x256xbf16>, vector<32x256xf32> -> vector<32x256xf32>
    %c0_14 = arith.constant 0 : index
    %c0_15 = arith.constant 0 : index
    %17 = vector.load %arg7[%c0_14, %c0_15] : memref<32x1xf32, #tpu.memory_space<vmem>>, vector<32x1xf32>
    %18 = vector.broadcast %17 : vector<32x1xf32> to vector<32x256xf32>
    %19 = arith.addf %16, %18 : vector<32x256xf32>
    %cst_16 = arith.constant 0.000000e+00 : f32
    %20 = vector.broadcast %cst_16 : f32 to vector<32x256xf32>
    %21 = arith.maximumf %19, %20 : vector<32x256xf32>
    %c0_17 = arith.constant 0 : index
    %c0_18 = arith.constant 0 : index
    %22 = vector.load %arg8[%c0_17, %c0_18] : memref<32x256xbf16, #tpu.memory_space<vmem>>, vector<32x256xbf16>
    %23 = arith.extf %22 : vector<32x256xbf16> to vector<32x256xf32>
    %24 = arith.mulf %21, %23 : vector<32x256xf32>
    %25 = vector.extract_strided_slice %24 {offsets = [0, 0], sizes = [8, 256], strides = [1, 1]} : vector<32x256xf32> to vector<8x256xf32>
    %26 = vector.extract_strided_slice %24 {offsets = [8, 0], sizes = [8, 256], strides = [1, 1]} : vector<32x256xf32> to vector<8x256xf32>
    %27 = arith.addf %25, %26 : vector<8x256xf32>
    %28 = vector.extract_strided_slice %24 {offsets = [16, 0], sizes = [8, 256], strides = [1, 1]} : vector<32x256xf32> to vector<8x256xf32>
    %29 = arith.addf %27, %28 : vector<8x256xf32>
    %30 = vector.extract_strided_slice %24 {offsets = [24, 0], sizes = [8, 256], strides = [1, 1]} : vector<32x256xf32> to vector<8x256xf32>
    %31 = arith.addf %29, %30 : vector<8x256xf32>
    %c0_19 = arith.constant 0 : index
    %c0_20 = arith.constant 0 : index
    %c0_21 = arith.constant 0 : index
    %32 = vector.load %arg9[%c0_19, %c0_20, %c0_21] : memref<1x8x256xf32, #tpu.memory_space<vmem>>, vector<1x8x256xf32>
    %33 = vector.shape_cast %32 : vector<1x8x256xf32> to vector<8x256xf32>
    %34 = vector.shape_cast %31 : vector<8x256xf32> to vector<1x8x256xf32>
    tpu.vector_store %arg9[%c0_19, %c0_20, %c0_21], %34 {strides = array<i32>} : memref<1x8x256xf32, #tpu.memory_space<vmem>>, vector<1x8x256xf32>,
    return
  }
  func.func @transform_0(%arg0: i32, %arg1: i32) -> (i32, i32, i32) {
    %c0_i32 = arith.constant 0 : i32
    %c0_i32_0 = arith.constant 0 : i32
    return %arg0, %c0_i32, %arg1 : i32, i32, i32
  }
  func.func @transform_1(%arg0: i32, %arg1: i32) -> (i32, i32) {
    %c0_i32 = arith.constant 0 : i32
    %c0_i32_0 = arith.constant 0 : i32
    %c0_i32_1 = arith.constant 0 : i32
    return %c0_i32, %c0_i32_0 : i32, i32
  }
  func.func @transform_2(%arg0: i32, %arg1: i32) -> (i32, i32) {
    %c0_i32 = arith.constant 0 : i32
    %c0_i32_0 = arith.constant 0 : i32
    %c0_i32_1 = arith.constant 0 : i32
    return %c0_i32, %c0_i32_0 : i32, i32
  }
  func.func @transform_3(%arg0: i32, %arg1: i32) -> (i32, i32) {
    %c0_i32 = arith.constant 0 : i32
    %c0_i32_0 = arith.constant 0 : i32
    %c0_i32_1 = arith.constant 0 : i32
    return %c0_i32, %c0_i32_0 : i32, i32
  }
  func.func @transform_4(%arg0: i32, %arg1: i32) -> (i32, i32) {
    %c0_i32 = arith.constant 0 : i32
    %c0_i32_0 = arith.constant 0 : i32
    %c0_i32_1 = arith.constant 0 : i32
    return %c0_i32, %c0_i32_0 : i32, i32
  }
  func.func @transform_5(%arg0: i32, %arg1: i32) -> (i32, i32) {
    %c0_i32 = arith.constant 0 : i32
    %c0_i32_0 = arith.constant 0 : i32
    %c0_i32_1 = arith.constant 0 : i32
    return %c0_i32, %c0_i32_0 : i32, i32
  }
  func.func @transform_6(%arg0: i32, %arg1: i32) -> (i32, i32) {
    %c0_i32 = arith.constant 0 : i32
    %c0_i32_0 = arith.constant 0 : i32
    return %c0_i32, %arg1 : i32, i32
  }
  func.func @transform_7(%arg0: i32, %arg1: i32) -> (i32, i32, i32) {
    %c0_i32 = arith.constant 0 : i32
    %c0_i32_0 = arith.constant 0 : i32
    return %arg0, %arg1, %c0_i32 : i32, i32, i32
  }
}

</mosaic_0001>

<llo_original>
// kernel: tpu_custom_call.1
$region0: #{tpu_custom_call.1}
  #allocation0 [shape = 'u32[]', space=smem, size = 0x4, offset = 0x4, fixed_abs, tag = 'smem constant byte address 0x4 - core index']
  #allocation1 [shape = 'u32[144,128]{1,0:T(1,128)}', space=vmem, size = 0x12000, scoped, tag = 'internal scratch']
  %s0 = inlined_call_operand.vmem [shape: bf16[2,16,256], index: 0, kind: input, shape index: {}]
  %s1 = inlined_call_operand.hbm [shape: bf16[8,16], index: 1, kind: input, shape index: {}]
  %s2 = inlined_call_operand.vmem [shape: bf16[4,8], index: 2, kind: input, shape index: {}]
  %s3 = inlined_call_operand.vmem [shape: f32[4,1], index: 3, kind: input, shape index: {}]
  %s4 = inlined_call_operand.vmem [shape: bf16[32,4], index: 4, kind: input, shape index: {}]
  %s5 = inlined_call_operand.vmem [shape: f32[32,1], index: 5, kind: input, shape index: {}]
  %s6 = inlined_call_operand.vmem [shape: bf16[32,256], index: 6, kind: input, shape index: {}]
  %s7 = inlined_call_operand.hbm [shape: f32[2,8,256], index: 7, kind: output, shape index: {}]
  %s8 = sld [smem:[#allocation0]]
  $region65: #{tpu_custom_call.1} parent=0
    _
  %s10 = ssub.s32 1, %s8
  %s11 = scalar_select 0, %s10, %s8
  $region1: #{tpu_custom_call.1} parent=0
    #allocation2 [shape = 'u8[2048]{0}', space=vmem, size = 0x800, scoped, tag = 'input window, operand 1, single buffered']
    #allocation3 [shape = 's32[2]{0}', space=sflag, size = 0x8, scoped, tag = 'scoped memory for tpu_custom_call.1']
    #allocation4 [shape = 's32[2]{0}', space=sflag, size = 0x8, scoped, tag = 'scoped memory for tpu_custom_call.1']
    #allocation5 [shape = 'u8[16384]{0}', space=vmem, size = 0x4000, scoped, tag = 'output window, operand 0']
    %12 = vsyncpa [#allocation3], 0
    %13 = vsyncpa [#allocation4], 0
    %s14 = scalar_lea.sflag [#allocation4], 1
    %15 = vsyncpa %s14, 0
    loop: start=0, step=1, limit=4
    $region2: #{tpu_custom_call.1} parent=1 // loop_pre_header
      _
    $region3: #{tpu_custom_call.1} parent=1 // loop_header
      %s17 = sphi 0, %s21
      %p18 = scmp.ge.s32.totalorder %s17, 4
      %s24 = sphi 0, %s36
      %s25 = sphi 0, %s32
      %s26 = sphi 0, %s24
      %s27 = sphi 0, %s25
      %s28 = sphi 0, %s26
      %s29 = sphi 0, %s27
      %s41 = sphi 0, %s43
      %s44 = sphi 0, %s41
      %s45 = sphi 0, %s44
      %s61 = sphi 0, %s45
      %s65 = sphi 0, %s65
      %s67 = sphi 0, %s65
      %s68 = sphi 0, %s67
      %s82 = sphi 0, %s68
      %s86 = sphi 0, %s86
      %s88 = sphi 0, %s86
      %s89 = sphi 0, %s88
      %s103 = sphi 0, %s89
      %s107 = sphi 0, %s107
      %s109 = sphi 0, %s107
      %s110 = sphi 0, %s109
      %s124 = sphi 0, %s110
      %s128 = sphi 0, %s128
      %s130 = sphi 0, %s128
      %s131 = sphi 0, %s130
      %s145 = sphi 0, %s131
      %s149 = sphi 0, %s149
      %s151 = sphi 0, %s149
      %s152 = sphi 0, %s151
      %s166 = sphi 0, %s152
      %s172 = sphi 0, %s174
      %s175 = sphi 0, %s172
      %s176 = sphi 0, %s175
      %s192 = sphi 0, %s176
      %s200 = sphi 0, %s202
      %s203 = sphi 0, %s200
      %s204 = sphi 0, %s203
      %s220 = sphi 0, %s204
    $region4: #{tpu_custom_call.1} parent=1 // loop_header_branch
      %20 = sbr.rel (%p18) target = $region8
    $region5: #{tpu_custom_call.1} parent=1 // loop_body
      %s22 = ssub.s32 %s17, 1
      %s23 = ssub.s32 %s17, 2
      %s30 = sadd.s32 1, %s25
      %p31 = scmp.ge.s32.totalorder %s30, 1
      %s32 = scalar_select %p31, 0, %s30
      %s33 = sadd.s32 1, %s24
      %s34 = scalar_select %p31, %s33, %s24
      %p35 = scmp.ge.s32.totalorder %s34, 2
      %s36 = scalar_select %p35, 0, %s34
      %s37 = ssub.s32 %s24, %s36
      %s38 = ssub.s32 %s25, %s32
      %s39 = sor.u32 %s37, %s38
      %p40 = scmp.eq.s32.totalorder %s39, 0
      %s42 = sadd.s32 %s41, 1
      %s43 = scalar_select %p40, %s41, %s42
      %p46 = pneg %p40
      %p47 = scmp.eq.s32.totalorder %s17, 1
      %p48 = por %p46, %p47
      %p49 = scmp.ne.s32.totalorder %s41, %s44
      %p50 = scmp.eq.s32.totalorder %s17, 0
      %p51 = por %p49, %p50
      %p52 = scmp.ne.s32.totalorder %s41, %s44
      %p53 = scmp.eq.s32.totalorder %s22, 1
      %p54 = por %p52, %p53
      %p55 = scmp.ne.s32.totalorder %s44, %s45
      %p56 = scmp.eq.s32.totalorder %s22, 0
      %p57 = por %p55, %p56
      %p58 = scmp.ne.s32.totalorder %s44, %s45
      %p59 = scmp.eq.s32.totalorder %s23, 1
      %p60 = por %p58, %p59
      %p62 = scmp.ne.s32.totalorder %s45, %s61
      %p63 = scmp.eq.s32.totalorder %s23, 0
      %p64 = por %p62, %p63
      %s66 = sadd.s32 %s65, 1
      %p69 = scmp.eq.s32.totalorder %s17, 1
      %p70 = scmp.ne.s32.totalorder %s65, %s67
      %p71 = scmp.eq.s32.totalorder %s17, 0
      %p72 = por %p70, %p71
      %p73 = scmp.ne.s32.totalorder %s65, %s67
      %p74 = scmp.eq.s32.totalorder %s22, 1
      %p75 = por %p73, %p74
      %p76 = scmp.ne.s32.totalorder %s67, %s68
      %p77 = scmp.eq.s32.totalorder %s22, 0
      %p78 = por %p76, %p77
      %p79 = scmp.ne.s32.totalorder %s67, %s68
      %p80 = scmp.eq.s32.totalorder %s23, 1
      %p81 = por %p79, %p80
      %p83 = scmp.ne.s32.totalorder %s68, %s82
      %p84 = scmp.eq.s32.totalorder %s23, 0
      %p85 = por %p83, %p84
      %s87 = sadd.s32 %s86, 1
      %p90 = scmp.eq.s32.totalorder %s17, 1
      %p91 = scmp.ne.s32.totalorder %s86, %s88
      %p92 = scmp.eq.s32.totalorder %s17, 0
      %p93 = por %p91, %p92
      %p94 = scmp.ne.s32.totalorder %s86, %s88
      %p95 = scmp.eq.s32.totalorder %s22, 1
      %p96 = por %p94, %p95
      %p97 = scmp.ne.s32.totalorder %s88, %s89
      %p98 = scmp.eq.s32.totalorder %s22, 0
      %p99 = por %p97, %p98
      %p100 = scmp.ne.s32.totalorder %s88, %s89
      %p101 = scmp.eq.s32.totalorder %s23, 1
      %p102 = por %p100, %p101
      %p104 = scmp.ne.s32.totalorder %s89, %s103
      %p105 = scmp.eq.s32.totalorder %s23, 0
      %p106 = por %p104, %p105
      %s108 = sadd.s32 %s107, 1
      %p111 = scmp.eq.s32.totalorder %s17, 1
      %p112 = scmp.ne.s32.totalorder %s107, %s109
      %p113 = scmp.eq.s32.totalorder %s17, 0
      %p114 = por %p112, %p113
      %p115 = scmp.ne.s32.totalorder %s107, %s109
      %p116 = scmp.eq.s32.totalorder %s22, 1
      %p117 = por %p115, %p116
      %p118 = scmp.ne.s32.totalorder %s109, %s110
      %p119 = scmp.eq.s32.totalorder %s22, 0
      %p120 = por %p118, %p119
      %p121 = scmp.ne.s32.totalorder %s109, %s110
      %p122 = scmp.eq.s32.totalorder %s23, 1
      %p123 = por %p121, %p122
      %p125 = scmp.ne.s32.totalorder %s110, %s124
      %p126 = scmp.eq.s32.totalorder %s23, 0
      %p127 = por %p125, %p126
      %s129 = sadd.s32 %s128, 1
      %p132 = scmp.eq.s32.totalorder %s17, 1
      %p133 = scmp.ne.s32.totalorder %s128, %s130
      %p134 = scmp.eq.s32.totalorder %s17, 0
      %p135 = por %p133, %p134
      %p136 = scmp.ne.s32.totalorder %s128, %s130
      %p137 = scmp.eq.s32.totalorder %s22, 1
      %p138 = por %p136, %p137
      %p139 = scmp.ne.s32.totalorder %s130, %s131
      %p140 = scmp.eq.s32.totalorder %s22, 0
      %p141 = por %p139, %p140
      %p142 = scmp.ne.s32.totalorder %s130, %s131
      %p143 = scmp.eq.s32.totalorder %s23, 1
      %p144 = por %p142, %p143
      %p146 = scmp.ne.s32.totalorder %s131, %s145
      %p147 = scmp.eq.s32.totalorder %s23, 0
      %p148 = por %p146, %p147
      %s150 = sadd.s32 %s149, 1
      %p153 = scmp.eq.s32.totalorder %s17, 1
      %p154 = scmp.ne.s32.totalorder %s149, %s151
      %p155 = scmp.eq.s32.totalorder %s17, 0
      %p156 = por %p154, %p155
      %p157 = scmp.ne.s32.totalorder %s149, %s151
      %p158 = scmp.eq.s32.totalorder %s22, 1
      %p159 = por %p157, %p158
      %p160 = scmp.ne.s32.totalorder %s151, %s152
      %p161 = scmp.eq.s32.totalorder %s22, 0
      %p162 = por %p160, %p161
      %p163 = scmp.ne.s32.totalorder %s151, %s152
      %p164 = scmp.eq.s32.totalorder %s23, 1
      %p165 = por %p163, %p164
      %p167 = scmp.ne.s32.totalorder %s152, %s166
      %p168 = scmp.eq.s32.totalorder %s23, 0
      %p169 = por %p167, %p168
      %s170 = ssub.s32 %s25, %s32
      %p171 = scmp.eq.s32.totalorder %s170, 0
      %s173 = sadd.s32 %s172, 1
      %s174 = scalar_select %p171, %s172, %s173
      %p177 = pneg %p171
      %p178 = scmp.eq.s32.totalorder %s17, 1
      %p179 = por %p177, %p178
      %p180 = scmp.ne.s32.totalorder %s172, %s175
      %p181 = scmp.eq.s32.totalorder %s17, 0
      %p182 = por %p180, %p181
      %p183 = scmp.ne.s32.totalorder %s172, %s175
      %p184 = scmp.eq.s32.totalorder %s22, 1
      %p185 = por %p183, %p184
      %p186 = scmp.ne.s32.totalorder %s175, %s176
      %p187 = scmp.eq.s32.totalorder %s22, 0
      %p188 = por %p186, %p187
      %p189 = scmp.ne.s32.totalorder %s175, %s176
      %p190 = scmp.eq.s32.totalorder %s23, 1
      %p191 = por %p189, %p190
      %p193 = scmp.ne.s32.totalorder %s176, %s192
      %p194 = scmp.eq.s32.totalorder %s23, 0
      %p195 = por %p193, %p194
      %s196 = ssub.s32 %s24, %s36
      %s197 = ssub.s32 %s25, %s32
      %s198 = sor.u32 %s196, %s197
      %p199 = scmp.eq.s32.totalorder %s198, 0
      %s201 = sadd.s32 %s200, 1
      %s202 = scalar_select %p199, %s200, %s201
      %p205 = pneg %p199
      %p206 = scmp.eq.s32.totalorder %s17, 1
      %p207 = por %p205, %p206
      %p208 = scmp.ne.s32.totalorder %s200, %s203
      %p209 = scmp.eq.s32.totalorder %s17, 0
      %p210 = por %p208, %p209
      %p211 = scmp.ne.s32.totalorder %s200, %s203
      %p212 = scmp.eq.s32.totalorder %s22, 1
      %p213 = por %p211, %p212
      %p214 = scmp.ne.s32.totalorder %s203, %s204
      %p215 = scmp.eq.s32.totalorder %s22, 0
      %p216 = por %p214, %p215
      %p217 = scmp.ne.s32.totalorder %s203, %s204
      %p218 = scmp.eq.s32.totalorder %s23, 1
      %p219 = por %p217, %p218
      %p221 = scmp.ne.s32.totalorder %s204, %s220
      %p222 = scmp.eq.s32.totalorder %s23, 0
      %p223 = por %p221, %p222
      %p224 = scmp.le.s32.totalorder 1, %s17
      %p225 = scmp.lt.s32.totalorder %s17, 3
      %p226 = pnand %p224, %p225
      %p227 = pneg %p226
      // Predicated region
      $region9: #{tpu_custom_call.1} parent=5 // pred_check
        _
      $region10: #{tpu_custom_call.1} parent=5 // pred_check_branch
        %229 = sbr.rel (%p226) target = $region12
      $region11: #{tpu_custom_call.1} parent=5 // pred_region
        %s230 = ssub.s32 %s17, 1
        // Predicated region
        $region13: #{tpu_custom_call.1} parent=11 // pred_check
          %p231 = pneg %p78
        $region14: #{tpu_custom_call.1} parent=11 // pred_check_branch
          %233 = sbr.rel (%p231) target = $region16
        $region15: #{tpu_custom_call.1} parent=11 // pred_region
          %s235 = ssub.s32 64, 64
          %236 = vsyncadd [#allocation3], %s235
          %s238 = sshll.u32 [#allocation2], 4
          %s239 = int_to_ptr.vmem [resolvable:$true] %s238
          %241 = dma.hbm_to_vmem [thread:$0]  %s1, 64, %s239, [#allocation3]
        $region16: #{tpu_custom_call.1} parent=11 // pred_fallthru
          _
        // Predicated region
        $region17: #{tpu_custom_call.1} parent=11 // pred_check
          %p242 = pneg %p99
        $region18: #{tpu_custom_call.1} parent=11 // pred_check_branch
          %244 = sbr.rel (%p242) target = $region20
        $region19: #{tpu_custom_call.1} parent=11 // pred_region
          _
        $region20: #{tpu_custom_call.1} parent=11 // pred_fallthru
          _
        // Predicated region
        $region21: #{tpu_custom_call.1} parent=11 // pred_check
          %p245 = pneg %p120
        $region22: #{tpu_custom_call.1} parent=11 // pred_check_branch
          %247 = sbr.rel (%p245) target = $region24
        $region23: #{tpu_custom_call.1} parent=11 // pred_region
          _
        $region24: #{tpu_custom_call.1} parent=11 // pred_fallthru
          _
        // Predicated region
        $region25: #{tpu_custom_call.1} parent=11 // pred_check
          %p248 = pneg %p141
        $region26: #{tpu_custom_call.1} parent=11 // pred_check_branch
          %250 = sbr.rel (%p248) target = $region28
        $region27: #{tpu_custom_call.1} parent=11 // pred_region
          _
        $region28: #{tpu_custom_call.1} parent=11 // pred_fallthru
          _
        // Predicated region
        $region29: #{tpu_custom_call.1} parent=11 // pred_check
          %p251 = pneg %p162
        $region30: #{tpu_custom_call.1} parent=11 // pred_check_branch
          %253 = sbr.rel (%p251) target = $region32
        $region31: #{tpu_custom_call.1} parent=11 // pred_region
          _
        $region32: #{tpu_custom_call.1} parent=11 // pred_fallthru
          _
        // Predicated region
        $region33: #{tpu_custom_call.1} parent=11 // pred_check
          %p254 = pneg %p188
        $region34: #{tpu_custom_call.1} parent=11 // pred_check_branch
          %256 = sbr.rel (%p254) target = $region36
        $region35: #{tpu_custom_call.1} parent=11 // pred_region
          %s257 = smul.u32 2, %s27
          %p258 = scmp.lt.s32.totalorder %s257, 1
          %s259 = scalar_select %p258, %s257, 1
          %s260 = smul.addr %s259, 4
          %s261 = scalar_lea.vmem %s6, %s260
          %s262 = smul.u32 2, %s27
        $region36: #{tpu_custom_call.1} parent=11 // pred_fallthru
          _
      $region12: #{tpu_custom_call.1} parent=5 // pred_fallthru
        _
      %p263 = scmp.lt.s32.totalorder %s17, 2
      // Predicated region
      $region37: #{tpu_custom_call.1} parent=5 // pred_check
        %p264 = pneg %p263
      $region38: #{tpu_custom_call.1} parent=5 // pred_check_branch
        %266 = sbr.rel (%p264) target = $region40
      $region39: #{tpu_custom_call.1} parent=5 // pred_region
        // Predicated region
        $region41: #{tpu_custom_call.1} parent=39 // pred_check
          %p267 = pneg %p51
        $region42: #{tpu_custom_call.1} parent=39 // pred_check_branch
          %269 = sbr.rel (%p267) target = $region44
        $region43: #{tpu_custom_call.1} parent=39 // pred_region
          %s270 = smul.u32 2, %s25
          %p271 = scmp.lt.s32.totalorder %s24, 1
          %s272 = scalar_select %p271, %s24, 1
          %p273 = scmp.lt.s32.totalorder %s270, 1
          %s274 = scalar_select %p273, %s270, 1
          %s275 = smul.addr %s272, 4
          %s276 = sadd.s32 %s274, %s275
          %s277 = smul.addr %s276, 4
          %s278 = scalar_lea.vmem %s0, %s277
          %s279 = smul.u32 2, %s25
        $region44: #{tpu_custom_call.1} parent=39 // pred_fallthru
          _
      $region40: #{tpu_custom_call.1} parent=5 // pred_fallthru
        _
      %p280 = scmp.le.s32.totalorder 1, %s17
      %p281 = scmp.lt.s32.totalorder %s17, 3
      %p282 = pnand %p280, %p281
      %p283 = pneg %p282
      // Predicated region
      $region45: #{tpu_custom_call.1} parent=5 // pred_check
        _
      $region46: #{tpu_custom_call.1} parent=5 // pred_check_branch
        %285 = sbr.rel (%p282) target = $region48
      $region47: #{tpu_custom_call.1} parent=5 // pred_region
        %s286 = ssub.s32 %s17, 1
        // Predicated region
        $region49: #{tpu_custom_call.1} parent=47 // pred_check
          %p287 = pneg %p78
        $region50: #{tpu_custom_call.1} parent=47 // pred_check_branch
          %289 = sbr.rel (%p287) target = $region52
        $region51: #{tpu_custom_call.1} parent=47 // pred_region
          %290 = dma.done [#allocation3], 64
        $region52: #{tpu_custom_call.1} parent=47 // pred_fallthru
          _
        %s291 = smul.u32 2, %s27
        %p292 = scmp.lt.s32.totalorder %s26, 1
        %s293 = scalar_select %p292, %s26, 1
        %p294 = scmp.lt.s32.totalorder %s291, 1
        %s295 = scalar_select %p294, %s291, 1
        %s296 = smul.addr %s293, 4
        %s297 = sadd.s32 %s295, %s296
        %s298 = smul.addr %s297, 4
        %s299 = scalar_lea.vmem %s0, %s298
        %p300 = pneg %p57
        %p301 = pneg %p54
        %p302 = pneg %p78
        %p303 = pneg %p75
        %p304 = pneg %p99
        %p305 = pneg %p96
        %p306 = pneg %p120
        %p307 = pneg %p117
        %p308 = pneg %p141
        %p309 = pneg %p138
        %p310 = pneg %p162
        %p311 = pneg %p159
        %s312 = smul.u32 2, %s27
        %p313 = scmp.lt.s32.totalorder %s312, 1
        %s314 = scalar_select %p313, %s312, 1
        %s315 = smul.addr %s314, 4
        %s316 = scalar_lea.vmem %s6, %s315
        %p317 = pneg %p188
        %p318 = pneg %p185
        %p319 = pneg %p216
        %p320 = pneg %p213
        %s321 = sand.u32 %s203, 1
        %s322 = scalar_lea.sflag [#allocation4], %s321
        %s323 = sand.u32 %s203, 1
        %s324 = smul.addr %s323, 16
        %s325 = scalar_lea.vmem [#allocation5], %s324
        %s326 = smul.u32 2, %s27
        %p327 = scmp.lt.s32.totalorder %s26, 1
        %s328 = scalar_select %p327, %s26, 1
        %p329 = scmp.lt.s32.totalorder %s326, 1
        %s330 = scalar_select %p329, %s326, 1
        %s331 = smul.addr %s328, 4
        %s332 = sadd.s32 %s330, %s331
        %s333 = smul.addr %s332, 4
        %s334 = scalar_lea.vmem %s0, %s333
        %s335 = smul.u32 2, %s27
        %s336 = smul.u32 2, %s27
        %p337 = scmp.lt.s32.totalorder %s336, 1
        %s338 = scalar_select %p337, %s336, 1
        %s339 = smul.addr %s338, 4
        %s340 = scalar_lea.vmem %s6, %s339
        %s341 = smul.u32 2, %s27
        %v343 = vld [vmem:[%s334] sm:$0xff]
        %v344 = vld [vmem:[%s334 + $0x8] sm:$0xff]
        %v345 = vld [vmem:[#allocation2] sm:$0xf]
        %v348 = vunpack.c.l.b16 %v343
        %v349 = vunpack.c.h.b16 %v343
        %v350 = vunpack.c.l.b16 %v344
        %v351 = vunpack.c.h.b16 %v344
        %v352 = vpack.c.b16 %v350, %v348
        %v353 = vpack.c.b16 %v351, %v349
        %vm356 = vcmask 130048
        %v358 = vsel %vm356, %v345, 0
        %360 = vmatprep.subr.bf16.mxu0 %v353
        %361 = vmatpush1.bf16.msra.mxu0 %v352
        %362 = vmatprep.subr.bf16.mxu0 0
        %363 = vmatpush1.bf16.msra.mxu0 0
        %364 = vmatprep.subr.bf16.mxu0 0
        %365 = vmatpush1.bf16.msra.mxu0 0
        %366 = vmatprep.subr.bf16.mxu0 0
        %367 = vmatpush1.bf16.msra.mxu0 0
        %368 = vmatprep.subr.bf16.mxu0 0
        %369 = vmatpush1.bf16.msra.mxu0 0
        %370 = vmatprep.subr.bf16.mxu0 0
        %371 = vmatpush1.bf16.msra.mxu0 0
        %372 = vmatprep.subr.bf16.mxu0 0
        %373 = vmatpush1.bf16.msra.mxu0 0
        %374 = vmatprep.subr.bf16.mxu0 0
        %375 = vmatpush1.bf16.msra.mxu0 0
        %376 = vmatprep.subr.bf16.mxu0 0
        %377 = vmatpush1.bf16.msra.mxu0 0
        %378 = vmatprep.subr.bf16.mxu0 0
        %379 = vmatpush1.bf16.msra.mxu0 0
        %380 = vmatprep.subr.bf16.mxu0 0
        %381 = vmatpush1.bf16.msra.mxu0 0
        %382 = vmatprep.subr.bf16.mxu0 0
        %383 = vmatpush1.bf16.msra.mxu0 0
        %384 = vmatprep.subr.bf16.mxu0 0
        %385 = vmatpush1.bf16.msra.mxu0 0
        %386 = vmatprep.subr.bf16.mxu0 0
        %387 = vmatpush1.bf16.msra.mxu0 0
        %388 = vmatprep.subr.bf16.mxu0 0
        %389 = vmatpush1.bf16.msra.mxu0 0
        %390 = vmatprep.subr.bf16.mxu0 0
        %391 = vmatpush1.bf16.msra.mxu0 0
        %392 = vmatprep.mubr.bf16.mxu0 0
        %393 = vmatmul.mubr.bf16.gmra.mrb[0].mxu0 %v358
        %v394 = vpop.f32.mrb[0].mxu0
        %v395 = vadd.f32 0.0, %v394
        %v396 = vpop.f32.mrb[0].mxu0
        %v397 = vadd.f32 0.0, %v396
        %v398 = vpop.f32.mrb[0].mxu0
        %v399 = vpop.f32.mrb[0].mxu0
        %400 = vdwg.mxu0
        %v401 = vmax.f32 %v395, 0.0
        %v402 = vmax.f32 %v397, 0.0
        %v403 = vld [vmem:[%s2] sm:$0x3]
        %v404 = vpack.c.bf16 %v401, %v401
        %v405 = vpack.c.bf16 %v402, %v402
        %v406 = vld [vmem:[%s3] sm:$0xf]
        %408 = vset.pattern.permute.xlu0 0
        %409 = vperm.xlu0 %408, %v406
        %v410 = vpop.permute.xlu0 %409
        %vm412 = vcmask 64512
        %v414 = vsel %vm412, %v403, 0
        %vm416 = vcmask 1043456
        %v418 = vsel %vm416, %v404, 0
        %v421 = vsel %vm416, %v405, 0
        %423 = vmatprep.subr.bf16.mxu0 %v421
        %424 = vmatpush1.bf16.msra.mxu0 %v418
        %425 = vmatprep.subr.bf16.mxu0 0
        %426 = vmatpush1.bf16.msra.mxu0 0
        %427 = vmatprep.subr.bf16.mxu0 0
        %428 = vmatpush1.bf16.msra.mxu0 0
        %429 = vmatprep.subr.bf16.mxu0 0
        %430 = vmatpush1.bf16.msra.mxu0 0
        %431 = vmatprep.subr.bf16.mxu0 0
        %432 = vmatpush1.bf16.msra.mxu0 0
        %433 = vmatprep.subr.bf16.mxu0 0
        %434 = vmatpush1.bf16.msra.mxu0 0
        %435 = vmatprep.subr.bf16.mxu0 0
        %436 = vmatpush1.bf16.msra.mxu0 0
        %437 = vmatprep.subr.bf16.mxu0 0
        %438 = vmatpush1.bf16.msra.mxu0 0
        %439 = vmatprep.subr.bf16.mxu0 0
        %440 = vmatpush1.bf16.msra.mxu0 0
        %441 = vmatprep.subr.bf16.mxu0 0
        %442 = vmatpush1.bf16.msra.mxu0 0
        %443 = vmatprep.subr.bf16.mxu0 0
        %444 = vmatpush1.bf16.msra.mxu0 0
        %445 = vmatprep.subr.bf16.mxu0 0
        %446 = vmatpush1.bf16.msra.mxu0 0
        %447 = vmatprep.subr.bf16.mxu0 0
        %448 = vmatpush1.bf16.msra.mxu0 0
        %449 = vmatprep.subr.bf16.mxu0 0
        %450 = vmatpush1.bf16.msra.mxu0 0
        %451 = vmatprep.subr.bf16.mxu0 0
        %452 = vmatpush1.bf16.msra.mxu0 0
        %453 = vmatprep.subr.bf16.mxu0 0
        %454 = vmatpush1.bf16.msra.mxu0 0
        %455 = vmatprep.mubr.bf16.mxu0 0
        %456 = vmatmul.mubr.bf16.gmra.mrb[0].mxu0 %v414
        %v457 = vpop.f32.mrb[0].mxu0
        %v458 = vadd.f32 %v410, %v457
        %v459 = vpop.f32.mrb[0].mxu0
        %v460 = vadd.f32 %v410, %v459
        %v461 = vpop.f32.mrb[0].mxu0
        %v462 = vpop.f32.mrb[0].mxu0
        %463 = vdwg.mxu0
        %v464 = vmax.f32 %v458, 0.0
        %v465 = vmax.f32 %v460, 0.0
        %v466 = vld [vmem:[%s4] sm:$0xf]
        %v467 = vld [vmem:[%s4 + $0x4] sm:$0xf]
        %v468 = vld [vmem:[%s4 + $0x8] sm:$0xf]
        %v469 = vld [vmem:[%s4 + $0xc] sm:$0xf]
        %v470 = vpack.c.bf16 %v464, %v464
        %v471 = vpack.c.bf16 %v465, %v465
        %v472 = vld [vmem:[%s5] sm:$0xff]
        %v473 = vld [vmem:[%s5 + $0x8] sm:$0xff]
        %v474 = vld [vmem:[%s5 + $0x10] sm:$0xff]
        %v475 = vld [vmem:[%s5 + $0x18] sm:$0xff]
        %477 = vset.pattern.permute.xlu0 0
        %478 = vperm.xlu0 %477, %v472
        %v479 = vpop.permute.xlu0 %478
        %482 = vset.pattern.permute.xlu0 0
        %483 = vperm.xlu0 %482, %v473
        %v484 = vpop.permute.xlu0 %483
        %487 = vset.pattern.permute.xlu0 0
        %488 = vperm.xlu0 %487, %v474
        %v489 = vpop.permute.xlu0 %488
        %492 = vset.pattern.permute.xlu0 0
        %493 = vperm.xlu0 %492, %v475
        %v494 = vpop.permute.xlu0 %493
        %v500 = vunpack.c.l.b16 %v466
        %v501 = vunpack.c.l.b16 %v467
        %v502 = vunpack.c.l.b16 %v468
        %v503 = vunpack.c.l.b16 %v469
        %v504 = vpack.c.b16 %v501, %v500
        %v505 = vpack.c.b16 %v503, %v502
        %vm506 = vcmask 31744
        %v508 = vsel %vm506, %v504, 0
        %v511 = vsel %vm506, %v505, 0
        %vm513 = vcmask 1041408
        %v515 = vsel %vm513, %v470, 0
        %v518 = vsel %vm513, %v471, 0
        %520 = vmatprep.subr.bf16.mxu0 %v518
        %521 = vmatpush1.bf16.msra.mxu0 %v515
        %522 = vmatprep.subr.bf16.mxu0 0
        %523 = vmatpush1.bf16.msra.mxu0 0
        %524 = vmatprep.subr.bf16.mxu0 0
        %525 = vmatpush1.bf16.msra.mxu0 0
        %526 = vmatprep.subr.bf16.mxu0 0
        %527 = vmatpush1.bf16.msra.mxu0 0
        %528 = vmatprep.subr.bf16.mxu0 0
        %529 = vmatpush1.bf16.msra.mxu0 0
        %530 = vmatprep.subr.bf16.mxu0 0
        %531 = vmatpush1.bf16.msra.mxu0 0
        %532 = vmatprep.subr.bf16.mxu0 0
        %533 = vmatpush1.bf16.msra.mxu0 0
        %534 = vmatprep.subr.bf16.mxu0 0
        %535 = vmatpush1.bf16.msra.mxu0 0
        %536 = vmatprep.subr.bf16.mxu0 0
        %537 = vmatpush1.bf16.msra.mxu0 0
        %538 = vmatprep.subr.bf16.mxu0 0
        %539 = vmatpush1.bf16.msra.mxu0 0
        %540 = vmatprep.subr.bf16.mxu0 0
        %541 = vmatpush1.bf16.msra.mxu0 0
        %542 = vmatprep.subr.bf16.mxu0 0
        %543 = vmatpush1.bf16.msra.mxu0 0
        %544 = vmatprep.subr.bf16.mxu0 0
        %545 = vmatpush1.bf16.msra.mxu0 0
        %546 = vmatprep.subr.bf16.mxu0 0
        %547 = vmatpush1.bf16.msra.mxu0 0
        %548 = vmatprep.subr.bf16.mxu0 0
        %549 = vmatpush1.bf16.msra.mxu0 0
        %550 = vmatprep.subr.bf16.mxu0 0
        %551 = vmatpush1.bf16.msra.mxu0 0
        %552 = vmatprep.mubr.bf16.mxu0 0
        %553 = vmatmul.mubr.bf16.gmra.mrb[0].mxu0 %v508
        %v554 = vpop.f32.mrb[0].mxu0
        %v555 = vadd.f32 %v479, %v554
        %v556 = vpop.f32.mrb[0].mxu0
        %v557 = vadd.f32 %v479, %v556
        %v558 = vpop.f32.mrb[0].mxu0
        %v559 = vadd.f32 %v484, %v558
        %v560 = vpop.f32.mrb[0].mxu0
        %v561 = vadd.f32 %v484, %v560
        %562 = vmatprep.mubr.bf16.mxu0 0
        %563 = vmatmul.mubr.bf16.gmra.mrb[0].mxu0 %v511
        %v564 = vpop.f32.mrb[0].mxu0
        %v565 = vadd.f32 %v489, %v564
        %v566 = vpop.f32.mrb[0].mxu0
        %v567 = vadd.f32 %v489, %v566
        %v568 = vpop.f32.mrb[0].mxu0
        %v569 = vadd.f32 %v494, %v568
        %v570 = vpop.f32.mrb[0].mxu0
        %v571 = vadd.f32 %v494, %v570
        %572 = vdwg.mxu0
        %v573 = vmax.f32 %v555, 0.0
        %v574 = vmax.f32 %v557, 0.0
        %v575 = vmax.f32 %v559, 0.0
        %v576 = vmax.f32 %v561, 0.0
        %v577 = vmax.f32 %v565, 0.0
        %v578 = vmax.f32 %v567, 0.0
        %v579 = vmax.f32 %v569, 0.0
        %v580 = vmax.f32 %v571, 0.0
        %v581 = vld [vmem:[%s340] sm:$0xff]
        %v582 = vld [vmem:[%s340 + $0x8] sm:$0xff]
        %v583 = vld [vmem:[%s340 + $0x10] sm:$0xff]
        %v584 = vld [vmem:[%s340 + $0x18] sm:$0xff]
        %v585 = vunpack.c.l.bf16 %v581
        %v586 = vunpack.c.h.bf16 %v581
        %v587 = vunpack.c.l.bf16 %v582
        %v588 = vunpack.c.h.bf16 %v582
        %v589 = vunpack.c.l.bf16 %v583
        %v590 = vunpack.c.h.bf16 %v583
        %v591 = vunpack.c.l.bf16 %v584
        %v592 = vunpack.c.h.bf16 %v584
        %v593 = vmul.f32 %v573, %v585
        %v594 = vmul.f32 %v574, %v586
        %v595 = vmul.f32 %v575, %v587
        %v596 = vmul.f32 %v576, %v588
        %v597 = vmul.f32 %v577, %v589
        %v598 = vmul.f32 %v578, %v590
        %v599 = vmul.f32 %v579, %v591
        %v600 = vmul.f32 %v580, %v592
        %v601 = vadd.f32 %v593, %v595
        %v602 = vadd.f32 %v594, %v596
        %v603 = vadd.f32 %v601, %v597
        %v604 = vadd.f32 %v602, %v598
        %v605 = vadd.f32 %v603, %v599
        %v606 = vadd.f32 %v604, %v600
        %607 = vst [vmem:[%s325] sm:$0xff] %v605
        %608 = vst [vmem:[%s325 + $0x8] sm:$0xff] %v606
        %s609 = sand.u32 %s203, 1
        %s610 = scalar_lea.sflag [#allocation4], %s609
        %s611 = sand.u32 %s203, 1
        %s612 = smul.addr %s611, 16
        %s613 = scalar_lea.vmem [#allocation5], %s612
        // Predicated region
        $region53: #{tpu_custom_call.1} parent=47 // pred_check
          %p614 = pneg %p213
        $region54: #{tpu_custom_call.1} parent=47 // pred_check_branch
          %616 = sbr.rel (%p614) target = $region56
        $region55: #{tpu_custom_call.1} parent=47 // pred_region
          %s618 = ssub.s32 256, 256
          %619 = vsyncadd %s610, %s618
          %s620 = smul.addr %s27, 2
          %s621 = smul.addr %s26, 2
          %s622 = sadd.s32 %s620, %s621
          %s623 = smul.addr %s622, 128
          %s624 = scalar_lea.hbm %s7, %s623
          %s626 = sshll.u32 %s613, 4
          %s627 = int_to_ptr.vmem [resolvable:$true] %s626
          %629 = dma.vmem_to_hbm [thread:$0]  %s627, 256, %s624, %s610
        $region56: #{tpu_custom_call.1} parent=47 // pred_fallthru
          _
      $region48: #{tpu_custom_call.1} parent=5 // pred_fallthru
        _
      %p630 = scmp.le.s32.totalorder 2, %s17
      // Predicated region
      $region57: #{tpu_custom_call.1} parent=5 // pred_check
        %p631 = pneg %p630
      $region58: #{tpu_custom_call.1} parent=5 // pred_check_branch
        %633 = sbr.rel (%p631) target = $region60
      $region59: #{tpu_custom_call.1} parent=5 // pred_region
        %s634 = ssub.s32 %s17, 2
        // Predicated region
        $region61: #{tpu_custom_call.1} parent=59 // pred_check
          %p635 = pneg %p219
        $region62: #{tpu_custom_call.1} parent=59 // pred_check_branch
          %637 = sbr.rel (%p635) target = $region64
        $region63: #{tpu_custom_call.1} parent=59 // pred_region
          %s638 = sand.u32 %s204, 1
          %s639 = scalar_lea.sflag [#allocation4], %s638
          %s640 = sand.u32 %s204, 1
          %s641 = smul.addr %s640, 16
          %s642 = scalar_lea.vmem [#allocation5], %s641
          %643 = dma.done %s639, 256
        $region64: #{tpu_custom_call.1} parent=59 // pred_fallthru
          _
      $region60: #{tpu_custom_call.1} parent=5 // pred_fallthru
        _
    $region6: #{tpu_custom_call.1} parent=1 // loop_footer
      %s21 = sadd.s32 1, %s17
    $region7: #{tpu_custom_call.1} parent=1 // loop_footer_branch
      %16 = sbr.rel target = $region3
    $region8: #{tpu_custom_call.1} parent=1 // loop_exit
      _
    %644 = vsyncpa [#allocation3], 1
    %s645 = scalar_lea.sflag [#allocation3], 1
    %646 = vsyncpa %s645, 1
    %647 = vsyncpa [#allocation4], 1
    %s648 = scalar_lea.sflag [#allocation4], 1
    %649 = vsyncpa %s648, 1

</llo_original>
